<compile_context>
chip_gen: v7x
topology: tpu7x:2x2x1
jax: 0.10.0
libtpu: 0.0.40
codegen_flags: <defaults>
</compile_context>

<pallas_src>
import jax
import jax.numpy as jnp
from jax.experimental import pallas as pl
from jax.experimental.pallas import tpu as pltpu

LRELU_SLOPE = 0.01   # torch.nn.LeakyReLU() default negative_slope
STRIDE = 2           # ConvBlock hardcodes stride=2 in its constructor
PAD = 1              # conv3x3 helper uses padding=1 (zeros)


def _round_up(x, m):
    return (x + m - 1) // m * m


def _matmul_bias_lrelu_kernel(p_ref, w_ref, b_ref, o_ref):
    """One M-tile of: out = LeakyReLU(patches @ w + b).

    p_ref: (TM, Kp)  im2col patches (P pixels packed per row)
    w_ref: (Kp, Cp)  block-diagonal packed conv weights (VMEM-resident)
    b_ref: (1,  Cp)  packed bias
    o_ref: (TM, Cp)  packed output; Cp is a multiple of 128 -> lane-dense store
    """
    acc = jnp.dot(p_ref[...], w_ref[...], preferred_element_type=jnp.float32)
    acc = acc + b_ref[...]
    o_ref[...] = jnp.where(acc >= 0, acc, LRELU_SLOPE * acc).astype(o_ref.dtype)


def conv_block_forward(x_nchw, weight_oihw, bias):
    """ConvBlock.forward: LeakyReLU(Conv2d(k=3, stride=2, pad=1, bias)(x)).

    x_nchw:      (N, Cin, H, W) float32
    weight_oihw: (Cout, Cin, 3, 3)
    bias:        (Cout,)
    returns:     (N, Cout, Ho, Wo)
    """
    N, Cin, H, W = x_nchw.shape
    Cout = weight_oihw.shape[0]
    Ho = (H + 2 * PAD - 3) // STRIDE + 1
    Wo = (W + 2 * PAD - 3) // STRIDE + 1
    K = 9 * Cin
    M = N * Ho * Wo

    # ---- wrapper-side im2col (pad + 9 strided slices fuse into one copy) ---
    x = jnp.transpose(x_nchw, (0, 2, 3, 1))                      # NCHW -> NHWC
    xp = jnp.pad(x, ((0, 0), (PAD, PAD), (PAD, PAD), (0, 0)))    # zero padding
    taps = [xp[:, ky:ky + STRIDE * Ho:STRIDE, kx:kx + STRIDE * Wo:STRIDE, :]
            for ky in range(3) for kx in range(3)]
    patches = jnp.concatenate(taps, axis=-1).reshape(M, K)       # (M, 9*Cin)

    # Weight taps: (Cout,Cin,3,3) -> (9*Cin, Cout), tap index = ky*3 + kx,
    # matching the tap-major / Cin-minor layout of `patches`.
    w_kc = jnp.transpose(weight_oihw, (2, 3, 1, 0)).reshape(K, Cout)

    # ---- pack P output pixels per 128-lane row (lane-dense stores) --------
    P = 128 // Cout if (Cout < 128 and 128 % Cout == 0) else 1
    Kp, Cp = P * K, P * Cout
    if P > 1:
        # Block-diagonal weights: row p*K+k, col q*Cout+c = (p==q) * w[k,c],
        # so packed row [patch_0 ; ... ; patch_{P-1}] @ w_packed yields
        # [out_0 ; ... ; out_{P-1}] -- the packed layout unpacks for free.
        eye = jnp.eye(P, dtype=w_kc.dtype)
        w_packed = jnp.einsum("pq,kc->pkqc", eye, w_kc).reshape(Kp, Cp)
        b_packed = jnp.tile(bias, P).reshape(1, Cp)
    else:
        w_packed = w_kc
        b_packed = bias.reshape(1, Cp)

    # Whole batch shares one big matmul M; tile packed rows by TM.
    m_rows = (M + P - 1) // P
    TM = min(256, _round_up(m_rows, 8))
    Mp = _round_up(m_rows, TM)              # packed rows, padded to TM multiple
    rows_needed = Mp * P
    if rows_needed != M:
        patches = jnp.pad(patches, ((0, rows_needed - M), (0, 0)))
    packed = patches.reshape(Mp, Kp)

    out_packed = pl.pallas_call(
        _matmul_bias_lrelu_kernel,
        out_shape=jax.ShapeDtypeStruct((Mp, Cp), x_nchw.dtype),
        grid_spec=pltpu.PrefetchScalarGridSpec(
            num_scalar_prefetch=0,
            grid=(Mp // TM,),
            in_specs=[
                pl.BlockSpec((TM, Kp), lambda m: (m, 0)),
                pl.BlockSpec((Kp, Cp), lambda m: (0, 0)),   # VMEM-resident
                pl.BlockSpec((1, Cp), lambda m: (0, 0)),    # VMEM-resident
            ],
            out_specs=pl.BlockSpec((TM, Cp), lambda m: (m, 0)),
        ),
        compiler_params=pltpu.CompilerParams(
            dimension_semantics=("parallel",)),   # v7x: shard M tiles over 2 TCs
    )(packed, w_packed, b_packed)

    # Free row-major unpack back to (M, Cout), then restore NCHW.
    out = out_packed.reshape(rows_needed, Cout)[:M]
    out = out.reshape(N, Ho, Wo, Cout)
    return jnp.transpose(out, (0, 3, 1, 2))


def _reference_forward(x_nchw, weight, bias):
    """Pure-JAX reference (lax.conv) for correctness checking."""
    y = jax.lax.conv_general_dilated(
        x_nchw, weight, window_strides=(STRIDE, STRIDE),
        padding=((PAD, PAD), (PAD, PAD)),
        dimension_numbers=("NCHW", "OIHW", "NCHW"))
    y = y + bias.reshape(1, -1, 1, 1)
    return jnp.where(y >= 0, y, LRELU_SLOPE * y)


if __name__ == "__main__":
    key = jax.random.PRNGKey(0)
    kx, kw, kb = jax.random.split(key, 3)

    N, Cin, H, W = 2, 4, 16, 16
    Cout = 64
    x = jax.random.normal(kx, (N, Cin, H, W), jnp.float32)
    lim = 1.0 / float((9 * Cin) ** 0.5)
    w = jax.random.uniform(kw, (Cout, Cin, 3, 3), jnp.float32, -lim, lim)
    b = jax.random.uniform(kb, (Cout,), jnp.float32, -lim, lim)

    out = jax.jit(conv_block_forward)(x, w, b)
    out = jax.block_until_ready(out)

    ref = _reference_forward(x, w, b)
    assert out.shape == (N, Cout, (H - 1) // 2 + 1, (W - 1) // 2 + 1), out.shape
    assert jnp.allclose(out, ref, atol=1e-4, rtol=1e-4), float(
        jnp.max(jnp.abs(out - ref)))

    print("KERNEL_OK")
</pallas_src>

<mosaic_0001>
module attributes {stable_mosaic.version = 11 : i64} {
  func.func @_matmul_bias_lrelu_kernel(%arg0: i32, %arg1: memref<64x72xf32, #tpu.memory_space<vmem>>, %arg2: memref<72x128xf32, #tpu.memory_space<vmem>>, %arg3: memref<1x128xf32, #tpu.memory_space<vmem>>, %arg4: memref<64x128xf32, #tpu.memory_space<vmem>>) attributes {dimension_semantics = [#tpu.dimension_semantics<parallel>], iteration_bounds = array<i64: 1>, scalar_prefetch = 0 : i64, scratch_operands = 0 : i64, tpu.core_type = #tpu.core_type<tc>, window_params = [{transform_indices = @transform_0, window_bounds = array<i64: 64, 72>}, {pipeline_mode = #tpu.pipeline_mode<synchronous>, transform_indices = @transform_1, window_bounds = array<i64: 72, 128>}, {pipeline_mode = #tpu.pipeline_mode<synchronous>, transform_indices = @transform_2, window_bounds = array<i64: 1, 128>}, {transform_indices = @transform_3, window_bounds = array<i64: 64, 128>}]} {
    %c0 = arith.constant 0 : index
    %c0_0 = arith.constant 0 : index
    %0 = vector.load %arg1[%c0, %c0_0] : memref<64x72xf32, #tpu.memory_space<vmem>>, vector<64x72xf32>
    %c0_1 = arith.constant 0 : index
    %c0_2 = arith.constant 0 : index
    %1 = vector.load %arg2[%c0_1, %c0_2] : memref<72x128xf32, #tpu.memory_space<vmem>>, vector<72x128xf32>
    %cst = arith.constant dense<0.000000e+00> : vector<64x128xf32>
    %2 = tpu.matmul %0, %1, %cst {dimension_numbers = #tpu.dot_dimension_numbers<[1], [0], [0], [1], [0, 0, 1, 1], [], []>} : vector<64x72xf32>, vector<72x128xf32>, vector<64x128xf32> -> vector<64x128xf32>
    %c0_3 = arith.constant 0 : index
    %c0_4 = arith.constant 0 : index
    %3 = vector.load %arg3[%c0_3, %c0_4] : memref<1x128xf32, #tpu.memory_space<vmem>>, vector<1x128xf32>
    %4 = vector.broadcast %3 : vector<1x128xf32> to vector<64x128xf32>
    %5 = arith.addf %2, %4 : vector<64x128xf32>
    %cst_5 = arith.constant 0.000000e+00 : f32
    %6 = vector.broadcast %cst_5 : f32 to vector<64x128xf32>
    %7 = arith.cmpf oge, %5, %6 : vector<64x128xf32>
    %cst_6 = arith.constant 0.00999999977 : f32
    %8 = vector.broadcast %cst_6 : f32 to vector<64x128xf32>
    %9 = arith.mulf %8, %5 : vector<64x128xf32>
    %10 = arith.select %7, %5, %9 : vector<64x128xi1>, vector<64x128xf32>
    %c0_7 = arith.constant 0 : index
    %c0_8 = arith.constant 0 : index
    %11 = vector.load %arg4[%c0_7, %c0_8] : memref<64x128xf32, #tpu.memory_space<vmem>>, vector<64x128xf32>
    tpu.vector_store %arg4[%c0_7, %c0_8], %10 {strides = array<i32>} : memref<64x128xf32, #tpu.memory_space<vmem>>, vector<64x128xf32>,
    return
  }
  func.func @transform_0(%arg0: i32) -> (i32, i32) {
    %c0_i32 = arith.constant 0 : i32
    %c0_i32_0 = arith.constant 0 : i32
    return %arg0, %c0_i32 : i32, i32
  }
  func.func @transform_1(%arg0: i32) -> (i32, i32) {
    %c0_i32 = arith.constant 0 : i32
    %c0_i32_0 = arith.constant 0 : i32
    %c0_i32_1 = arith.constant 0 : i32
    return %c0_i32, %c0_i32_0 : i32, i32
  }
  func.func @transform_2(%arg0: i32) -> (i32, i32) {
    %c0_i32 = arith.constant 0 : i32
    %c0_i32_0 = arith.constant 0 : i32
    %c0_i32_1 = arith.constant 0 : i32
    return %c0_i32, %c0_i32_0 : i32, i32
  }
  func.func @transform_3(%arg0: i32) -> (i32, i32) {
    %c0_i32 = arith.constant 0 : i32
    %c0_i32_0 = arith.constant 0 : i32
    return %arg0, %c0_i32 : i32, i32
  }
}

</mosaic_0001>

<llo_original>
// kernel: tile.8
$region0: #{tile.8}
  #allocation0 [shape = 's32[1]{0}', space=sflag, size = 0x4, scoped, tag = 'scoped memory for tile.8']
  %s0 = inlined_call_operand.vmem [shape: f32[64], index: 0, kind: input, shape index: {}]
  %s1 = inlined_call_operand.vmem [shape: f32[2,64], index: 1, kind: output, shape index: {}]
  // Predicated region
  $region2: #{tile.8} parent=0 // pred_check
    _
  $region3: #{tile.8} parent=0 // pred_check_branch
    %3 = sbr.rel (0) target = $region5
  $region4: #{tile.8} parent=0 // pred_region
    _
  $region5: #{tile.8} parent=0 // pred_fallthru
    _
  %v4 = vld [vmem:[%s0] ss:$0 sm:$0xff]
  %5 = vst [vmem:[%s1] sm:$0x3] %v4

// kernel: tile.9
$region0: #{tile.9}
  %s0 = inlined_call_operand.vmem [shape: f32[2,64], index: 0, kind: input, shape index: {}]
  %s1 = inlined_call_operand.vmem [shape: f32[1,128], index: 1, kind: output, shape index: {}]
  $region1: #{tile.9} parent=0
    #allocation0 [shape = 'u8[4096]{0}', space=vmem, size = 0x1000, scoped, tag = 'scoped mem for output reshape']
    #allocation1 [shape = 'u8[4096]{0}', space=vmem, size = 0x1000, scoped, tag = 'scoped mem for input reshape']
    %s3 = sshllo.u32 0, 2
    %v4 = vld [vmem:[%s0] sm:%s3]
    %5 = vst [vmem:[#allocation1] sm:%s3] %v4
    %v6 = vld [vmem:[#allocation1] sm:$0x1]
    %vm7 = vcmask 523264
    %8 = vst.msk [vmem:[#allocation0] sm:$0x1] %vm7, %v6
    %s9 = scalar_lea.vmem [#allocation1], 1
    %v10 = vld [vmem:[%s9] sm:$0x1]
    %11 = vrot.lane.b32.xlu0 %v10, 64
    %v12 = vpop.permute.xlu0 %11
    %vm13 = vcmask 1048064
    %14 = vst.msk [vmem:[#allocation0] sm:$0x1] %vm13, %v12
    %s16 = sshllo.u32 0, 1
    %v18 = vld [vmem:[#allocation0] sm:%s16]
    %s19 = sshllo.u32 0, 1
    %20 = vst [vmem:[%s1] sm:%s19] %v18

// kernel: conv_block_forward.1
$region0: #{conv_block_forward.1}
  #allocation0 [shape = 'u32[]', space=smem, size = 0x4, offset = 0x4, fixed_abs, tag = 'smem constant byte address 0x4 - core index']
  #allocation1 [shape = 'u32[144,128]{1,0:T(1,128)}', space=vmem, size = 0x12000, scoped, tag = 'internal scratch']
  %s0 = inlined_call_operand.vmem [shape: f32[64,72], index: 0, kind: input, shape index: {}]
  %s1 = inlined_call_operand.vmem [shape: f32[72,128], index: 1, kind: input, shape index: {}]
  %s2 = inlined_call_operand.vmem [shape: f32[1,128], index: 2, kind: input, shape index: {}]
  %s3 = inlined_call_operand.vmem [shape: f32[64,128], index: 3, kind: output, shape index: {}]
  %s4 = sld [smem:[#allocation0]]
  $region22: #{conv_block_forward.1} parent=0
    _
  %s6 = ssub.s32 1, %s4
  %s7 = scalar_select 0, %s6, %s4
  // Predicated region
  $region2: #{conv_block_forward.1} parent=0 // pred_check
    _
  $region3: #{conv_block_forward.1} parent=0 // pred_check_branch
    %9 = sbr.rel (0) target = $region5
  $region4: #{conv_block_forward.1} parent=0 // pred_region
    _
  $region5: #{conv_block_forward.1} parent=0 // pred_fallthru
    _
  // Predicated region
  $region6: #{conv_block_forward.1} parent=0 // pred_check
    _
  $region7: #{conv_block_forward.1} parent=0 // pred_check_branch
    %11 = sbr.rel (0) target = $region9
  $region8: #{conv_block_forward.1} parent=0 // pred_region
    _
  $region9: #{conv_block_forward.1} parent=0 // pred_fallthru
    _
  // Predicated region
  $region10: #{conv_block_forward.1} parent=0 // pred_check
    _
  $region11: #{conv_block_forward.1} parent=0 // pred_check_branch
    %13 = sbr.rel (0) target = $region13
  $region12: #{conv_block_forward.1} parent=0 // pred_region
    _
  $region13: #{conv_block_forward.1} parent=0 // pred_fallthru
    _
  %v14 = vld [vmem:[%s0] sm:$0xff]
  %v15 = vld [vmem:[%s0 + $0x8] sm:$0xff]
  %v16 = vld [vmem:[%s0 + $0x10] sm:$0xff]
  %v17 = vld [vmem:[%s0 + $0x18] sm:$0xff]
  %v18 = vld [vmem:[%s0 + $0x20] sm:$0xff]
  %v19 = vld [vmem:[%s0 + $0x28] sm:$0xff]
  %v20 = vld [vmem:[%s0 + $0x30] sm:$0xff]
  %v21 = vld [vmem:[%s0 + $0x38] sm:$0xff]
  %v22 = vld [vmem:[%s1] sm:$0xff]
  %v23 = vld [vmem:[%s1 + $0x8] sm:$0xff]
  %v24 = vld [vmem:[%s1 + $0x10] sm:$0xff]
  %v25 = vld [vmem:[%s1 + $0x18] sm:$0xff]
  %v26 = vld [vmem:[%s1 + $0x20] sm:$0xff]
  %v27 = vld [vmem:[%s1 + $0x28] sm:$0xff]
  %v28 = vld [vmem:[%s1 + $0x30] sm:$0xff]
  %v29 = vld [vmem:[%s1 + $0x38] sm:$0xff]
  %v30 = vld [vmem:[%s1 + $0x40] sm:$0xff]
  %v31 = vld [vmem:[%s2] sm:$0x1]
  %v33 = vlaneseq
  %v34 = vshrl.u32 %v33, 7
  %v35 = vsub.s32 0, %v34
  %v36 = vrot.slane %v31, %v35
  %vm38 = vcmask 588800
  %v40 = vsel %vm38, %v14, 0
  %v43 = vsel %vm38, %v15, 0
  %v46 = vsel %vm38, %v16, 0
  %v49 = vsel %vm38, %v17, 0
  %v52 = vsel %vm38, %v18, 0
  %v55 = vsel %vm38, %v19, 0
  %v58 = vsel %vm38, %v20, 0
  %v61 = vsel %vm38, %v21, 0
  %63 = vmatprep.subr.mxu0 0.0
  %64 = vmatpush1.msra.mxu0 %v22
  %65 = vmatprep.subr.mxu0 0.0
  %66 = vmatpush1.msra.mxu0 %v23
  %67 = vmatprep.subr.mxu0 0.0
  %68 = vmatpush1.msra.mxu0 %v24
  %69 = vmatprep.subr.mxu0 0.0
  %70 = vmatpush1.msra.mxu0 %v25
  %71 = vmatprep.subr.mxu0 0.0
  %72 = vmatpush1.msra.mxu0 %v26
  %73 = vmatprep.subr.mxu0 0.0
  %74 = vmatpush1.msra.mxu0 %v27
  %75 = vmatprep.subr.mxu0 0.0
  %76 = vmatpush1.msra.mxu0 %v28
  %77 = vmatprep.subr.mxu0 0.0
  %78 = vmatpush1.msra.mxu0 %v29
  %79 = vmatprep.subr.mxu0 0.0
  %80 = vmatpush1.msra.mxu0 %v30
  %81 = vmatprep.subr.mxu0 0.0
  %82 = vmatpush1.msra.mxu0 0.0
  %83 = vmatprep.subr.mxu0 0.0
  %84 = vmatpush1.msra.mxu0 0.0
  %85 = vmatprep.subr.mxu0 0.0
  %86 = vmatpush1.msra.mxu0 0.0
  %87 = vmatprep.subr.mxu0 0.0
  %88 = vmatpush1.msra.mxu0 0.0
  %89 = vmatprep.subr.mxu0 0.0
  %90 = vmatpush1.msra.mxu0 0.0
  %91 = vmatprep.subr.mxu0 0.0
  %92 = vmatpush1.msra.mxu0 0.0
  %93 = vmatprep.subr.mxu0 0.0
  %94 = vmatpush1.msra.mxu0 0.0
  %95 = vmatprep.subr.mxu0 0.0
  %96 = vmatpush1.msra.mxu0 0.0
  %97 = vmatprep.subr.mxu0 0.0
  %98 = vmatpush1.msra.mxu0 0.0
  %99 = vmatprep.subr.mxu0 0.0
  %100 = vmatpush1.msra.mxu0 0.0
  %101 = vmatprep.subr.mxu0 0.0
  %102 = vmatpush1.msra.mxu0 0.0
  %103 = vmatprep.subr.mxu0 0.0
  %104 = vmatpush1.msra.mxu0 0.0
  %105 = vmatprep.subr.mxu0 0.0
  %106 = vmatpush1.msra.mxu0 0.0
  %107 = vmatprep.subr.mxu0 0.0
  %108 = vmatpush1.msra.mxu0 0.0
  %109 = vmatprep.subr.mxu0 0.0
  %110 = vmatpush1.msra.mxu0 0.0
  %111 = vmatprep.subr.mxu0 0.0
  %112 = vmatpush1.msra.mxu0 0.0
  %113 = vmatprep.subr.mxu0 0.0
  %114 = vmatpush1.msra.mxu0 0.0
  %115 = vmatprep.subr.mxu0 0.0
  %116 = vmatpush1.msra.mxu0 0.0
  %117 = vmatprep.subr.mxu0 0.0
  %118 = vmatpush1.msra.mxu0 0.0
  %119 = vmatprep.subr.mxu0 0.0
  %120 = vmatpush1.msra.mxu0 0.0
  %121 = vmatprep.subr.mxu0 0.0
  %122 = vmatpush1.msra.mxu0 0.0
  %123 = vmatprep.subr.mxu0 0.0
  %124 = vmatpush1.msra.mxu0 0.0
  %125 = vmatprep.subr.mxu0 0.0
  %126 = vmatpush1.msra.mxu0 0.0
  %127 = vmatprep.mubr.f32.mxu0 0.0
  %128 = vmatmul.mubr.f32.gmra.mrb[0].mxu0 %v40
  %v129 = vpop.f32.mrb[0].mxu0
  %v130 = vadd.f32 %v36, %v129
  %v131 = vpop.f32.mrb[0].mxu0
  %132 = vmatprep.mubr.f32.mxu0 0.0
  %133 = vmatmul.mubr.f32.gmra.mrb[0].mxu0 %v43
  %v134 = vpop.f32.mrb[0].mxu0
  %v135 = vadd.f32 %v36, %v134
  %v136 = vpop.f32.mrb[0].mxu0
  %137 = vmatprep.mubr.f32.mxu0 0.0
  %138 = vmatmul.mubr.f32.gmra.mrb[0].mxu0 %v46
  %v139 = vpop.f32.mrb[0].mxu0
  %v140 = vadd.f32 %v36, %v139
  %v141 = vpop.f32.mrb[0].mxu0
  %142 = vmatprep.mubr.f32.mxu0 0.0
  %143 = vmatmul.mubr.f32.gmra.mrb[0].mxu0 %v49
  %v144 = vpop.f32.mrb[0].mxu0
  %v145 = vadd.f32 %v36, %v144
  %v146 = vpop.f32.mrb[0].mxu0
  %147 = vmatprep.mubr.f32.mxu0 0.0
  %148 = vmatmul.mubr.f32.gmra.mrb[0].mxu0 %v52
  %v149 = vpop.f32.mrb[0].mxu0
  %v150 = vadd.f32 %v36, %v149
  %v151 = vpop.f32.mrb[0].mxu0
  %152 = vmatprep.mubr.f32.mxu0 0.0
  %153 = vmatmul.mubr.f32.gmra.mrb[0].mxu0 %v55
  %v154 = vpop.f32.mrb[0].mxu0
  %v155 = vadd.f32 %v36, %v154
  %v156 = vpop.f32.mrb[0].mxu0
  %157 = vmatprep.mubr.f32.mxu0 0.0
  %158 = vmatmul.mubr.f32.gmra.mrb[0].mxu0 %v58
  %v159 = vpop.f32.mrb[0].mxu0
  %v160 = vadd.f32 %v36, %v159
  %v161 = vpop.f32.mrb[0].mxu0
  %162 = vmatprep.mubr.f32.mxu0 0.0
  %163 = vmatmul.mubr.f32.gmra.mrb[0].mxu0 %v61
  %v164 = vpop.f32.mrb[0].mxu0
  %v165 = vadd.f32 %v36, %v164
  %v166 = vpop.f32.mrb[0].mxu0
  %167 = vdwg.mxu0
  %vm168 = vcmp.ge.f32.partialorder %v130, 0.0
  %vm169 = vcmp.ge.f32.partialorder %v135, 0.0
  %vm170 = vcmp.ge.f32.partialorder %v140, 0.0
  %vm171 = vcmp.ge.f32.partialorder %v145, 0.0
  %vm172 = vcmp.ge.f32.partialorder %v150, 0.0
  %vm173 = vcmp.ge.f32.partialorder %v155, 0.0
  %vm174 = vcmp.ge.f32.partialorder %v160, 0.0
  %vm175 = vcmp.ge.f32.partialorder %v165, 0.0
  %v176 = vmul.f32 %v130, 0.01
  %v177 = vmul.f32 %v135, 0.01
  %v178 = vmul.f32 %v140, 0.01
  %v179 = vmul.f32 %v145, 0.01
  %v180 = vmul.f32 %v150, 0.01
  %v181 = vmul.f32 %v155, 0.01
  %v182 = vmul.f32 %v160, 0.01
  %v183 = vmul.f32 %v165, 0.01
  %v184 = vsel %vm168, %v130, %v176
  %v185 = vsel %vm169, %v135, %v177
  %v186 = vsel %vm170, %v140, %v178
  %v187 = vsel %vm171, %v145, %v179
  %v188 = vsel %vm172, %v150, %v180
  %v189 = vsel %vm173, %v155, %v181
  %v190 = vsel %vm174, %v160, %v182
  %v191 = vsel %vm175, %v165, %v183
  %192 = vst [vmem:[%s3] sm:$0xff] %v184
  %193 = vst [vmem:[%s3 + $0x8] sm:$0xff] %v185
  %194 = vst [vmem:[%s3 + $0x10] sm:$0xff] %v186
  %195 = vst [vmem:[%s3 + $0x18] sm:$0xff] %v187
  %196 = vst [vmem:[%s3 + $0x20] sm:$0xff] %v188
  %197 = vst [vmem:[%s3 + $0x28] sm:$0xff] %v189
  %198 = vst [vmem:[%s3 + $0x30] sm:$0xff] %v190
  %199 = vst [vmem:[%s3 + $0x38] sm:$0xff] %v191
  // Predicated region
  $region14: #{conv_block_forward.1} parent=0 // pred_check
    _
  $region15: #{conv_block_forward.1} parent=0 // pred_check_branch
    %201 = sbr.rel (0) target = $region17
  $region16: #{conv_block_forward.1} parent=0 // pred_region
    _
  $region17: #{conv_block_forward.1} parent=0 // pred_fallthru
    _
  // Predicated region
  $region18: #{conv_block_forward.1} parent=0 // pred_check
    _
  $region19: #{conv_block_forward.1} parent=0 // pred_check_branch
    %203 = sbr.rel (0) target = $region21
  $region20: #{conv_block_forward.1} parent=0 // pred_region
    _
  $region21: #{conv_block_forward.1} parent=0 // pred_fallthru
    _

</llo_original>
